<compile_context>
chip_gen: v5e
topology: v5e:2x2
jax: 0.10.0
libtpu: 0.0.40
codegen_flags: <defaults>
</compile_context>

<pallas_src>
import functools

import jax
import jax.numpy as jnp
from jax import lax
from jax.experimental import pallas as pl
from jax.experimental.pallas import tpu as pltpu


def _seq_tiling(n, force_tile=None):
    """Pick a lane/MXU-friendly sequence tile; pad n when needed.

    Returns (tile, padded_n).  Prefers 256 (fills the 256-wide MXU on
    v6e/v7x; on v5e 128 would suffice but 256 is still correct), then 128.
    Irregular n > 128 is padded up to a multiple of 128 (padded keys are
    masked inside the attention kernel, padded query rows are sliced off).
    """
    if force_tile is not None:
        t = int(force_tile)
        return t, ((n + t - 1) // t) * t
    if n % 256 == 0:
        return 256, n
    if n % 128 == 0:
        return 128, n
    if n <= 128:
        # Block dims equal to the full array dims are always legal.
        return n, n
    n_pad = ((n + 127) // 128) * 128
    return 128, n_pad


def _vmem_limit_bytes(estimate):
    """Explicit scoped-VMEM limit with headroom (capped at v7x's 64 MiB)."""
    limit = int(1.5 * estimate) + (4 << 20)
    return max(min(limit, 64 << 20), 32 << 20)


# ---------------------- Pass 1: QKV projection ----------------------

def _qkv_proj_kernel(x_ref, w_ref, b_ref, q_ref, k_ref, v_ref, *, C, scale):
    x = x_ref[0]                                                  # (TN, C)
    # Three (TN,C)x(C,C) dots via static lane slices of Wqkv: only one (TN,C)
    # f32 intermediate live at a time; cast/scale/store overlaps the next dot.
    q = jnp.dot(x, w_ref[:, 0:C],
                preferred_element_type=jnp.float32) + b_ref[:, 0:C]
    q_ref[0] = (q * scale).astype(q_ref.dtype)                    # fold attn scale into Q
    k = jnp.dot(x, w_ref[:, C:2 * C],
                preferred_element_type=jnp.float32) + b_ref[:, C:2 * C]
    k_ref[0] = k.astype(k_ref.dtype)
    v = jnp.dot(x, w_ref[:, 2 * C:3 * C],
                preferred_element_type=jnp.float32) + b_ref[:, 2 * C:3 * C]
    v_ref[0] = v.astype(v_ref.dtype)


# --------- Pass 2: flash attention + output projection --------------

def _attn_proj_kernel(q_ref, k_ref, v_ref, wp_ref, bp_ref, o_ref,
                      m_sc, l_sc, acc_sc, *,
                      num_heads, head_dim, tkv, n_valid):
    kv = pl.program_id(2)

    @pl.when(kv == 0)
    def _():
        m_sc[...] = jnp.full_like(m_sc, -jnp.inf)
        l_sc[...] = jnp.zeros_like(l_sc)
        acc_sc[...] = jnp.zeros_like(acc_sc)

    q = q_ref[0]                                   # (TQ,  C) pre-scaled, compute dtype
    k = k_ref[0]                                   # (TKV, C)
    v = v_ref[0]                                   # (TKV, C)

    if n_valid is not None:
        # Mask padded key columns (sequence was padded to a tile multiple).
        key_idx = kv * tkv + lax.broadcasted_iota(jnp.int32, (1, tkv), 1)
        key_bias = jnp.where(key_idx < n_valid,
                             jnp.float32(0.0), jnp.float32(-1e30))
    else:
        key_bias = None

    for h in range(num_heads):                     # static unroll; lane slices are cheap
        lo, hi = h * head_dim, (h + 1) * head_dim
        q_h = q[:, lo:hi]                          # (TQ,  D)
        k_h = k[:, lo:hi]                          # (TKV, D)
        v_h = v[:, lo:hi]                          # (TKV, D)

        # scores (TQ, TKV): contract over head_dim, keep TKV on the lane axis.
        s = lax.dot_general(q_h, k_h, (((1,), (1,)), ((), ())),
                            preferred_element_type=jnp.float32)
        if key_bias is not None:
            s = s + key_bias

        # online (flash) softmax update, all f32
        m_prev = m_sc[:, h:h + 1]                  # (TQ, 1)
        m_new = jnp.maximum(m_prev, jnp.max(s, axis=-1, keepdims=True))
        alpha = jnp.exp(m_prev - m_new)            # EUP
        p = jnp.exp(s - m_new)                     # EUP
        l_sc[:, h:h + 1] = alpha * l_sc[:, h:h + 1] + jnp.sum(p, axis=-1, keepdims=True)
        m_sc[:, h:h + 1] = m_new

        # attn_drop: identity (inference)
        o_h = jnp.dot(p.astype(v_h.dtype), v_h,
                      preferred_element_type=jnp.float32)          # (TQ, D) f32
        acc_sc[:, lo:hi] = alpha * acc_sc[:, lo:hi] + o_h           # scratch accumulate

    @pl.when(kv == pl.num_programs(2) - 1)
    def _():
        # deferred normalization (per head), then one output-projection dot
        for h in range(num_heads):
            lo, hi = h * head_dim, (h + 1) * head_dim
            inv = pl.reciprocal(l_sc[:, h:h + 1], approx=True)
            acc_sc[:, lo:hi] = acc_sc[:, lo:hi] * inv
        out = acc_sc[...]                                           # (TQ, C) f32
        y = jnp.dot(out.astype(wp_ref.dtype), wp_ref[...],
                    preferred_element_type=jnp.float32) + bp_ref[...]
        # proj_drop: identity (inference)
        o_ref[0] = y.astype(o_ref.dtype)


# ----------------------------- wrapper -------------------------------

def multi_head_self_attention(x, wqkv_t, bqkv, wproj_t, bproj, num_heads, *,
                              compute_dtype=jnp.bfloat16, seq_tile=None):
    """x: (B, N, C); wqkv_t: (C, 3C); bqkv: (3C,); wproj_t: (C, C); bproj: (C,).

    Weights are pre-transposed (in, out) so the kernels compute x @ W + b,
    equivalent to PyTorch's x @ W.T + b.  compute_dtype controls the MXU
    operand dtype (bf16 default — all TPU MXUs are bf16-native); accumulation
    and softmax math are always f32.  Q/K/V intermediates are stored in
    compute_dtype in HBM (documented precision contract for the bf16 path).
    """
    B, N, C = x.shape
    assert C % num_heads == 0
    head_dim = C // num_heads
    scale = head_dim ** (-0.5)
    out_dtype = x.dtype
    cdt = jnp.dtype(compute_dtype)
    cb = cdt.itemsize
    ob = jnp.dtype(out_dtype).itemsize

    tile, Np = _seq_tiling(N, force_tile=seq_tile)
    n_valid = None if Np == N else N

    xp = x if Np == N else jnp.pad(x, ((0, 0), (0, Np - N), (0, 0)))
    xc = xp.astype(cdt)
    wqkv_c = wqkv_t.astype(cdt)
    wproj_c = wproj_t.astype(cdt)
    bqkv2 = bqkv.reshape(1, 3 * C).astype(jnp.float32)
    bproj2 = bproj.reshape(1, C).astype(jnp.float32)

    TN = TQ = TKV = tile
    nq = Np // TQ
    nkv = Np // TKV

    # Constant index_map -> single resident VMEM buffer (no useless double buffer).
    weight_resident = pl.Buffered(1)

    # ---- pass 1: QKV projection, grid (B, Np // TN) ----
    p1_vmem = (2 * TN * C * cb            # x tile, double buffered
               + 3 * C * C * cb           # Wqkv resident
               + 6 * TN * C * cb          # q/k/v out tiles, double buffered
               + 4 * TN * C * 4           # f32 dot temporaries
               + 3 * C * 4)               # bias
    qkv_cost = pl.CostEstimate(
        flops=2 * B * Np * C * 3 * C,
        transcendentals=0,
        bytes_accessed=(B * Np * C + 3 * C * C + 3 * B * Np * C) * cb + 3 * C * 4)

    q, k, v = pl.pallas_call(
        functools.partial(_qkv_proj_kernel, C=C, scale=scale),
        out_shape=(jax.ShapeDtypeStruct((B, Np, C), cdt),
                   jax.ShapeDtypeStruct((B, Np, C), cdt),
                   jax.ShapeDtypeStruct((B, Np, C), cdt)),
        grid_spec=pltpu.PrefetchScalarGridSpec(
            num_scalar_prefetch=0,
            grid=(B, Np // TN),
            in_specs=[
                pl.BlockSpec((1, TN, C), lambda b, i: (b, i, 0)),            # x tile
                pl.BlockSpec((C, 3 * C), lambda b, i: (0, 0),
                             pipeline_mode=weight_resident),                 # Wqkv^T
                pl.BlockSpec((1, 3 * C), lambda b, i: (0, 0),
                             pipeline_mode=weight_resident),                 # bqkv
            ],
            out_specs=[
                pl.BlockSpec((1, TN, C), lambda b, i: (b, i, 0)),            # Q (scaled)
                pl.BlockSpec((1, TN, C), lambda b, i: (b, i, 0)),            # K
                pl.BlockSpec((1, TN, C), lambda b, i: (b, i, 0)),            # V
            ],
        ),
        compiler_params=pltpu.CompilerParams(
            dimension_semantics=("parallel", "parallel"),
            vmem_limit_bytes=_vmem_limit_bytes(p1_vmem)),
        cost_estimate=qkv_cost,
    )(xc, wqkv_c, bqkv2)

    # ---- pass 2: flash attention + output projection, grid (B, nq, nkv) ----
    p2_vmem = (2 * TQ * C * cb            # Q tile, double buffered
               + 4 * TKV * C * cb         # K + V tiles, double buffered
               + C * C * cb               # Wproj resident
               + 2 * TQ * C * ob          # output tile, double buffered
               + TQ * C * 4               # acc scratch
               + 2 * TQ * 128 * 4         # m/l scratch (lane padded)
               + 4 * TQ * TKV * 4         # score/prob f32 temporaries
               + 2 * TQ * C * 4)          # projection temporaries
    attn_cost = pl.CostEstimate(
        flops=4 * B * num_heads * Np * Np * head_dim + 2 * B * Np * C * C,
        transcendentals=B * num_heads * Np * Np,
        bytes_accessed=(B * Np * C + 2 * B * Np * C * nq + C * C) * cb
                       + C * 4 + B * Np * C * ob)

    y = pl.pallas_call(
        functools.partial(_attn_proj_kernel, num_heads=num_heads,
                          head_dim=head_dim, tkv=TKV, n_valid=n_valid),
        out_shape=jax.ShapeDtypeStruct((B, Np, C), out_dtype),
        grid_spec=pltpu.PrefetchScalarGridSpec(
            num_scalar_prefetch=0,
            grid=(B, nq, nkv),
            in_specs=[
                pl.BlockSpec((1, TQ, C), lambda b, i, kv: (b, i, 0)),        # Q tile
                pl.BlockSpec((1, TKV, C), lambda b, i, kv: (b, kv, 0)),      # K tile
                pl.BlockSpec((1, TKV, C), lambda b, i, kv: (b, kv, 0)),      # V tile
                pl.BlockSpec((C, C), lambda b, i, kv: (0, 0),
                             pipeline_mode=weight_resident),                 # Wproj^T
                pl.BlockSpec((1, C), lambda b, i, kv: (0, 0),
                             pipeline_mode=weight_resident),                 # bproj
            ],
            out_specs=pl.BlockSpec((1, TQ, C), lambda b, i, kv: (b, i, 0)),
            scratch_shapes=[
                pltpu.VMEM((TQ, num_heads), jnp.float32),   # running max m
                pltpu.VMEM((TQ, num_heads), jnp.float32),   # running sum l
                pltpu.VMEM((TQ, C), jnp.float32),           # output accumulator
            ],
        ),
        compiler_params=pltpu.CompilerParams(
            dimension_semantics=("parallel", "parallel", "arbitrary"),
            vmem_limit_bytes=_vmem_limit_bytes(p2_vmem)),
        cost_estimate=attn_cost,
    )(q, k, v, wproj_c, bproj2)

    if Np != N:
        y = y[:, :N, :]
    return y


# ----------------------------- reference -----------------------------

def reference_mhsa(x, wqkv_t, bqkv, wproj_t, bproj, num_heads):
    B, N, C = x.shape
    hd = C // num_heads
    scale = hd ** (-0.5)
    qkv = x @ wqkv_t + bqkv                                   # (B, N, 3C)
    qkv = qkv.reshape(B, N, 3, num_heads, hd).transpose(2, 0, 3, 1, 4)
    q, k, v = qkv[0], qkv[1], qkv[2]                          # (B, H, N, hd)
    attn = (q @ jnp.swapaxes(k, -2, -1)) * scale
    attn = jax.nn.softmax(attn, axis=-1)
    out = (attn @ v).transpose(0, 2, 1, 3).reshape(B, N, C)
    return out @ wproj_t + bproj


if __name__ == "__main__":
    # Small shapes consistent with the module: batch=2, seq=8, dim=32, heads=8.
    B, N, C = 2, 8, 32
    num_heads = 8

    key = jax.random.PRNGKey(0)
    kx, kw1, kb1, kw2, kb2 = jax.random.split(key, 5)

    x = jax.random.normal(kx, (B, N, C), dtype=jnp.float32)

    # nn.Linear(dim, dim*3) / nn.Linear(dim, dim) params, stored pre-transposed (in, out).
    wqkv_t = jax.random.normal(kw1, (C, 3 * C), dtype=jnp.float32) * (1.0 / jnp.sqrt(C))
    bqkv = jax.random.normal(kb1, (3 * C,), dtype=jnp.float32) * 0.02
    wproj_t = jax.random.normal(kw2, (C, C), dtype=jnp.float32) * (1.0 / jnp.sqrt(C))
    bproj = jax.random.normal(kb2, (C,), dtype=jnp.float32) * 0.02

    y_ref = reference_mhsa(x, wqkv_t, bqkv, wproj_t, bproj, num_heads)

    # f32 MXU-operand path (tight tolerance)
    y32 = multi_head_self_attention(x, wqkv_t, bqkv, wproj_t, bproj, num_heads,
                                    compute_dtype=jnp.float32)
    y32 = jax.block_until_ready(y32)
    assert y32.shape == (B, N, C)
    assert jnp.allclose(y32, y_ref, atol=5e-3, rtol=5e-3), "f32 kernel mismatch vs reference"

    # default bf16 MXU-operand path (f32 accumulation preserved on every dot)
    y16 = multi_head_self_attention(x, wqkv_t, bqkv, wproj_t, bproj, num_heads)
    y16 = jax.block_until_ready(y16)
    assert y16.shape == (B, N, C)
    assert jnp.allclose(y16.astype(jnp.float32), y_ref, atol=1e-1, rtol=1e-1), \
        "bf16 kernel mismatch vs reference"

    # padded + masked sequence path: N=12 with forced tile 8 -> padded to 16,
    # exercises multi-KV-tile online softmax and key-padding masking.
    N2 = 12
    x2 = jax.random.normal(jax.random.PRNGKey(1), (B, N2, C), dtype=jnp.float32)
    y2_ref = reference_mhsa(x2, wqkv_t, bqkv, wproj_t, bproj, num_heads)
    y2 = multi_head_self_attention(x2, wqkv_t, bqkv, wproj_t, bproj, num_heads,
                                   compute_dtype=jnp.float32, seq_tile=8)
    y2 = jax.block_until_ready(y2)
    assert y2.shape == (B, N2, C)
    assert jnp.allclose(y2, y2_ref, atol=5e-3, rtol=5e-3), \
        "padded/masked kernel mismatch vs reference"

    print("KERNEL_OK")
</pallas_src>

<mosaic_0001>
module attributes {stable_mosaic.version = 11 : i64} {
  func.func @_qkv_proj_kernel(%arg0: i32, %arg1: i32, %arg2: memref<1x8x32xf32, #tpu.memory_space<vmem>>, %arg3: memref<32x96xf32, #tpu.memory_space<vmem>>, %arg4: memref<1x96xf32, #tpu.memory_space<vmem>>, %arg5: memref<1x8x32xf32, #tpu.memory_space<vmem>>, %arg6: memref<1x8x32xf32, #tpu.memory_space<vmem>>, %arg7: memref<1x8x32xf32, #tpu.memory_space<vmem>>) attributes {dimension_semantics = [#tpu.dimension_semantics<parallel>, #tpu.dimension_semantics<parallel>], iteration_bounds = array<i64: 2, 1>, scalar_prefetch = 0 : i64, scratch_operands = 0 : i64, tpu.core_type = #tpu.core_type<tc>, window_params = [{transform_indices = @transform_0, window_bounds = array<i64: 1, 8, 32>}, {pipeline_mode = #tpu.pipeline_mode<synchronous>, transform_indices = @transform_1, window_bounds = array<i64: 32, 96>}, {pipeline_mode = #tpu.pipeline_mode<synchronous>, transform_indices = @transform_2, window_bounds = array<i64: 1, 96>}, {transform_indices = @transform_3, window_bounds = array<i64: 1, 8, 32>}, {transform_indices = @transform_4, window_bounds = array<i64: 1, 8, 32>}, {transform_indices = @transform_5, window_bounds = array<i64: 1, 8, 32>}]} {
    %c0 = arith.constant 0 : index
    %c0_0 = arith.constant 0 : index
    %c0_1 = arith.constant 0 : index
    %0 = vector.load %arg2[%c0, %c0_0, %c0_1] : memref<1x8x32xf32, #tpu.memory_space<vmem>>, vector<1x8x32xf32>
    %1 = vector.shape_cast %0 : vector<1x8x32xf32> to vector<8x32xf32>
    %c0_2 = arith.constant 0 : index
    %c0_3 = arith.constant 0 : index
    %2 = vector.load %arg3[%c0_2, %c0_3] : memref<32x96xf32, #tpu.memory_space<vmem>>, vector<32x32xf32>
    %cst = arith.constant dense<0.000000e+00> : vector<8x32xf32>
    %3 = tpu.matmul %1, %2, %cst {dimension_numbers = #tpu.dot_dimension_numbers<[1], [0], [0], [1], [0, 0, 1, 1], [], []>} : vector<8x32xf32>, vector<32x32xf32>, vector<8x32xf32> -> vector<8x32xf32>
    %c0_4 = arith.constant 0 : index
    %c0_5 = arith.constant 0 : index
    %4 = vector.load %arg4[%c0_4, %c0_5] : memref<1x96xf32, #tpu.memory_space<vmem>>, vector<1x32xf32>
    %5 = vector.broadcast %4 : vector<1x32xf32> to vector<8x32xf32>
    %6 = arith.addf %3, %5 : vector<8x32xf32>
    %cst_6 = arith.constant 5.000000e-01 : f32
    %7 = vector.broadcast %cst_6 : f32 to vector<8x32xf32>
    %8 = arith.mulf %6, %7 : vector<8x32xf32>
    %c0_7 = arith.constant 0 : index
    %c0_8 = arith.constant 0 : index
    %c0_9 = arith.constant 0 : index
    %9 = vector.load %arg5[%c0_7, %c0_8, %c0_9] : memref<1x8x32xf32, #tpu.memory_space<vmem>>, vector<1x8x32xf32>
    %10 = vector.shape_cast %9 : vector<1x8x32xf32> to vector<8x32xf32>
    %11 = vector.shape_cast %8 : vector<8x32xf32> to vector<1x8x32xf32>
    tpu.vector_store %arg5[%c0_7, %c0_8, %c0_9], %11 {strides = array<i32>} : memref<1x8x32xf32, #tpu.memory_space<vmem>>, vector<1x8x32xf32>,
    %c0_10 = arith.constant 0 : index
    %c32 = arith.constant 32 : index
    %12 = vector.load %arg3[%c0_10, %c32] : memref<32x96xf32, #tpu.memory_space<vmem>>, vector<32x32xf32>
    %cst_11 = arith.constant dense<0.000000e+00> : vector<8x32xf32>
    %13 = tpu.matmul %1, %12, %cst_11 {dimension_numbers = #tpu.dot_dimension_numbers<[1], [0], [0], [1], [0, 0, 1, 1], [], []>} : vector<8x32xf32>, vector<32x32xf32>, vector<8x32xf32> -> vector<8x32xf32>
    %c0_12 = arith.constant 0 : index
    %c32_13 = arith.constant 32 : index
    %14 = vector.load %arg4[%c0_12, %c32_13] : memref<1x96xf32, #tpu.memory_space<vmem>>, vector<1x32xf32>
    %15 = vector.broadcast %14 : vector<1x32xf32> to vector<8x32xf32>
    %16 = arith.addf %13, %15 : vector<8x32xf32>
    %c0_14 = arith.constant 0 : index
    %c0_15 = arith.constant 0 : index
    %c0_16 = arith.constant 0 : index
    %17 = vector.load %arg6[%c0_14, %c0_15, %c0_16] : memref<1x8x32xf32, #tpu.memory_space<vmem>>, vector<1x8x32xf32>
    %18 = vector.shape_cast %17 : vector<1x8x32xf32> to vector<8x32xf32>
    %19 = vector.shape_cast %16 : vector<8x32xf32> to vector<1x8x32xf32>
    tpu.vector_store %arg6[%c0_14, %c0_15, %c0_16], %19 {strides = array<i32>} : memref<1x8x32xf32, #tpu.memory_space<vmem>>, vector<1x8x32xf32>,
    %c0_17 = arith.constant 0 : index
    %c64 = arith.constant 64 : index
    %20 = vector.load %arg3[%c0_17, %c64] : memref<32x96xf32, #tpu.memory_space<vmem>>, vector<32x32xf32>
    %cst_18 = arith.constant dense<0.000000e+00> : vector<8x32xf32>
    %21 = tpu.matmul %1, %20, %cst_18 {dimension_numbers = #tpu.dot_dimension_numbers<[1], [0], [0], [1], [0, 0, 1, 1], [], []>} : vector<8x32xf32>, vector<32x32xf32>, vector<8x32xf32> -> vector<8x32xf32>
    %c0_19 = arith.constant 0 : index
    %c64_20 = arith.constant 64 : index
    %22 = vector.load %arg4[%c0_19, %c64_20] : memref<1x96xf32, #tpu.memory_space<vmem>>, vector<1x32xf32>
    %23 = vector.broadcast %22 : vector<1x32xf32> to vector<8x32xf32>
    %24 = arith.addf %21, %23 : vector<8x32xf32>
    %c0_21 = arith.constant 0 : index
    %c0_22 = arith.constant 0 : index
    %c0_23 = arith.constant 0 : index
    %25 = vector.load %arg7[%c0_21, %c0_22, %c0_23] : memref<1x8x32xf32, #tpu.memory_space<vmem>>, vector<1x8x32xf32>
    %26 = vector.shape_cast %25 : vector<1x8x32xf32> to vector<8x32xf32>
    %27 = vector.shape_cast %24 : vector<8x32xf32> to vector<1x8x32xf32>
    tpu.vector_store %arg7[%c0_21, %c0_22, %c0_23], %27 {strides = array<i32>} : memref<1x8x32xf32, #tpu.memory_space<vmem>>, vector<1x8x32xf32>,
    return
  }
  func.func @transform_0(%arg0: i32, %arg1: i32) -> (i32, i32, i32) {
    %c0_i32 = arith.constant 0 : i32
    %c0_i32_0 = arith.constant 0 : i32
    return %arg0, %arg1, %c0_i32 : i32, i32, i32
  }
  func.func @transform_1(%arg0: i32, %arg1: i32) -> (i32, i32) {
    %c0_i32 = arith.constant 0 : i32
    %c0_i32_0 = arith.constant 0 : i32
    %c0_i32_1 = arith.constant 0 : i32
    return %c0_i32, %c0_i32_0 : i32, i32
  }
  func.func @transform_2(%arg0: i32, %arg1: i32) -> (i32, i32) {
    %c0_i32 = arith.constant 0 : i32
    %c0_i32_0 = arith.constant 0 : i32
    %c0_i32_1 = arith.constant 0 : i32
    return %c0_i32, %c0_i32_0 : i32, i32
  }
  func.func @transform_3(%arg0: i32, %arg1: i32) -> (i32, i32, i32) {
    %c0_i32 = arith.constant 0 : i32
    %c0_i32_0 = arith.constant 0 : i32
    return %arg0, %arg1, %c0_i32 : i32, i32, i32
  }
  func.func @transform_4(%arg0: i32, %arg1: i32) -> (i32, i32, i32) {
    %c0_i32 = arith.constant 0 : i32
    %c0_i32_0 = arith.constant 0 : i32
    return %arg0, %arg1, %c0_i32 : i32, i32, i32
  }
  func.func @transform_5(%arg0: i32, %arg1: i32) -> (i32, i32, i32) {
    %c0_i32 = arith.constant 0 : i32
    %c0_i32_0 = arith.constant 0 : i32
    return %arg0, %arg1, %c0_i32 : i32, i32, i32
  }
}

</mosaic_0001>

<llo_original>
// kernel: tpu_custom_call.1
$region0: #{tpu_custom_call.1}
  #allocation0 [shape = 'u32[]', space=smem, size = 0x4, offset = 0x4, fixed_abs, tag = 'smem constant byte address 0x4 - core index']
  #allocation1 [shape = 'u32[72,128]{1,0:T(1,128)}', space=vmem, size = 0x9000, scoped, tag = 'internal scratch']
  %s0 = inlined_call_operand.hbm [shape: f32[2,8,32], index: 0, kind: input, shape index: {}]
  %s1 = inlined_call_operand.hbm [shape: f32[32,96], index: 1, kind: input, shape index: {}]
  %s2 = inlined_call_operand.vmem [shape: f32[1,96], index: 2, kind: input, shape index: {}]
  %s3 = inlined_call_operand.hbm [shape: f32[2,8,32], index: 3, kind: output, shape index: {0}]
  %s4 = inlined_call_operand.hbm [shape: f32[2,8,32], index: 4, kind: output, shape index: {1}]
  %s5 = inlined_call_operand.hbm [shape: f32[2,8,32], index: 5, kind: output, shape index: {2}]
  %6 = xla_tuple %s3, %s4, %s5
  %s7 = sld [smem:[#allocation0]]
  $region69: #{tpu_custom_call.1} parent=0
    _
  %s9 = ssub.s32 1, %s7
  %s10 = scalar_select 0, %s9, %s7
  $region1: #{tpu_custom_call.1} parent=0
    #allocation2 [shape = 'u8[8192]{0}', space=vmem, size = 0x2000, scoped, tag = 'input window, operand 0']
    #allocation3 [shape = 's32[2]{0}', space=sflag, size = 0x8, scoped, tag = 'scoped memory for tpu_custom_call.1']
    #allocation4 [shape = 's32[2]{0}', space=sflag, size = 0x8, scoped, tag = 'scoped memory for tpu_custom_call.1']
    #allocation5 [shape = 'u8[16384]{0}', space=vmem, size = 0x4000, scoped, tag = 'input window, operand 1, single buffered']
    #allocation6 [shape = 's32[1]{0}', space=sflag, size = 0x4, scoped, tag = 'scoped memory for tpu_custom_call.1']
    #allocation7 [shape = 'u8[8192]{0}', space=vmem, size = 0x2000, scoped, tag = 'output window, operand 0']
    #allocation8 [shape = 'u8[8192]{0}', space=vmem, size = 0x2000, scoped, tag = 'output window, operand 1']
    #allocation9 [shape = 's32[2]{0}', space=sflag, size = 0x8, scoped, tag = 'scoped memory for tpu_custom_call.1']
    #allocation10 [shape = 'u8[8192]{0}', space=vmem, size = 0x2000, scoped, tag = 'output window, operand 2']
    %11 = vsyncpa [#allocation3], 0
    %s12 = scalar_lea.sflag [#allocation3], 1
    %13 = vsyncpa %s12, 0
    %14 = vsyncpa [#allocation6], 0
    %15 = vsyncpa [#allocation4], 0
    %s16 = scalar_lea.sflag [#allocation4], 1
    %17 = vsyncpa %s16, 0
    %18 = vsyncpa [#allocation9], 0
    %s19 = scalar_lea.sflag [#allocation9], 1
    %20 = vsyncpa %s19, 0
    loop: start=0, step=1, limit=4
    $region2: #{tpu_custom_call.1} parent=1 // loop_pre_header
      _
    $region3: #{tpu_custom_call.1} parent=1 // loop_header
      %s22 = sphi 0, %s26
      %p23 = scmp.ge.s32.totalorder %s22, 4
      %s29 = sphi 0, %s41
      %s30 = sphi 0, %s37
      %s31 = sphi 0, %s29
      %s32 = sphi 0, %s30
      %s33 = sphi 0, %s31
      %s34 = sphi 0, %s32
      %s46 = sphi 0, %s48
      %s49 = sphi 0, %s46
      %s50 = sphi 0, %s49
      %s66 = sphi 0, %s50
      %s70 = sphi 0, %s70
      %s72 = sphi 0, %s70
      %s73 = sphi 0, %s72
      %s87 = sphi 0, %s73
      %s91 = sphi 0, %s91
      %s93 = sphi 0, %s91
      %s94 = sphi 0, %s93
      %s108 = sphi 0, %s94
      %s116 = sphi 0, %s118
      %s119 = sphi 0, %s116
      %s120 = sphi 0, %s119
      %s136 = sphi 0, %s120
      %s144 = sphi 0, %s146
      %s147 = sphi 0, %s144
      %s148 = sphi 0, %s147
      %s164 = sphi 0, %s148
      %s172 = sphi 0, %s174
      %s175 = sphi 0, %s172
      %s176 = sphi 0, %s175
      %s192 = sphi 0, %s176
    $region4: #{tpu_custom_call.1} parent=1 // loop_header_branch
      %25 = sbr.rel (%p23) target = $region8
    $region5: #{tpu_custom_call.1} parent=1 // loop_body
      %s27 = ssub.s32 %s22, 1
      %s28 = ssub.s32 %s22, 2
      %s35 = sadd.s32 1, %s30
      %p36 = scmp.ge.s32.totalorder %s35, 1
      %s37 = scalar_select %p36, 0, %s35
      %s38 = sadd.s32 1, %s29
      %s39 = scalar_select %p36, %s38, %s29
      %p40 = scmp.ge.s32.totalorder %s39, 2
      %s41 = scalar_select %p40, 0, %s39
      %s42 = ssub.s32 %s29, %s41
      %s43 = ssub.s32 %s30, %s37
      %s44 = sor.u32 %s42, %s43
      %p45 = scmp.eq.s32.totalorder %s44, 0
      %s47 = sadd.s32 %s46, 1
      %s48 = scalar_select %p45, %s46, %s47
      %p51 = pneg %p45
      %p52 = scmp.eq.s32.totalorder %s22, 1
      %p53 = por %p51, %p52
      %p54 = scmp.ne.s32.totalorder %s46, %s49
      %p55 = scmp.eq.s32.totalorder %s22, 0
      %p56 = por %p54, %p55
      %p57 = scmp.ne.s32.totalorder %s46, %s49
      %p58 = scmp.eq.s32.totalorder %s27, 1
      %p59 = por %p57, %p58
      %p60 = scmp.ne.s32.totalorder %s49, %s50
      %p61 = scmp.eq.s32.totalorder %s27, 0
      %p62 = por %p60, %p61
      %p63 = scmp.ne.s32.totalorder %s49, %s50
      %p64 = scmp.eq.s32.totalorder %s28, 1
      %p65 = por %p63, %p64
      %p67 = scmp.ne.s32.totalorder %s50, %s66
      %p68 = scmp.eq.s32.totalorder %s28, 0
      %p69 = por %p67, %p68
      %s71 = sadd.s32 %s70, 1
      %p74 = scmp.eq.s32.totalorder %s22, 1
      %p75 = scmp.ne.s32.totalorder %s70, %s72
      %p76 = scmp.eq.s32.totalorder %s22, 0
      %p77 = por %p75, %p76
      %p78 = scmp.ne.s32.totalorder %s70, %s72
      %p79 = scmp.eq.s32.totalorder %s27, 1
      %p80 = por %p78, %p79
      %p81 = scmp.ne.s32.totalorder %s72, %s73
      %p82 = scmp.eq.s32.totalorder %s27, 0
      %p83 = por %p81, %p82
      %p84 = scmp.ne.s32.totalorder %s72, %s73
      %p85 = scmp.eq.s32.totalorder %s28, 1
      %p86 = por %p84, %p85
      %p88 = scmp.ne.s32.totalorder %s73, %s87
      %p89 = scmp.eq.s32.totalorder %s28, 0
      %p90 = por %p88, %p89
      %s92 = sadd.s32 %s91, 1
      %p95 = scmp.eq.s32.totalorder %s22, 1
      %p96 = scmp.ne.s32.totalorder %s91, %s93
      %p97 = scmp.eq.s32.totalorder %s22, 0
      %p98 = por %p96, %p97
      %p99 = scmp.ne.s32.totalorder %s91, %s93
      %p100 = scmp.eq.s32.totalorder %s27, 1
      %p101 = por %p99, %p100
      %p102 = scmp.ne.s32.totalorder %s93, %s94
      %p103 = scmp.eq.s32.totalorder %s27, 0
      %p104 = por %p102, %p103
      %p105 = scmp.ne.s32.totalorder %s93, %s94
      %p106 = scmp.eq.s32.totalorder %s28, 1
      %p107 = por %p105, %p106
      %p109 = scmp.ne.s32.totalorder %s94, %s108
      %p110 = scmp.eq.s32.totalorder %s28, 0
      %p111 = por %p109, %p110
      %s112 = ssub.s32 %s29, %s41
      %s113 = ssub.s32 %s30, %s37
      %s114 = sor.u32 %s112, %s113
      %p115 = scmp.eq.s32.totalorder %s114, 0
      %s117 = sadd.s32 %s116, 1
      %s118 = scalar_select %p115, %s116, %s117
      %p121 = pneg %p115
      %p122 = scmp.eq.s32.totalorder %s22, 1
      %p123 = por %p121, %p122
      %p124 = scmp.ne.s32.totalorder %s116, %s119
      %p125 = scmp.eq.s32.totalorder %s22, 0
      %p126 = por %p124, %p125
      %p127 = scmp.ne.s32.totalorder %s116, %s119
      %p128 = scmp.eq.s32.totalorder %s27, 1
      %p129 = por %p127, %p128
      %p130 = scmp.ne.s32.totalorder %s119, %s120
      %p131 = scmp.eq.s32.totalorder %s27, 0
      %p132 = por %p130, %p131
      %p133 = scmp.ne.s32.totalorder %s119, %s120
      %p134 = scmp.eq.s32.totalorder %s28, 1
      %p135 = por %p133, %p134
      %p137 = scmp.ne.s32.totalorder %s120, %s136
      %p138 = scmp.eq.s32.totalorder %s28, 0
      %p139 = por %p137, %p138
      %s140 = ssub.s32 %s29, %s41
      %s141 = ssub.s32 %s30, %s37
      %s142 = sor.u32 %s140, %s141
      %p143 = scmp.eq.s32.totalorder %s142, 0
      %s145 = sadd.s32 %s144, 1
      %s146 = scalar_select %p143, %s144, %s145
      %p149 = pneg %p143
      %p150 = scmp.eq.s32.totalorder %s22, 1
      %p151 = por %p149, %p150
      %p152 = scmp.ne.s32.totalorder %s144, %s147
      %p153 = scmp.eq.s32.totalorder %s22, 0
      %p154 = por %p152, %p153
      %p155 = scmp.ne.s32.totalorder %s144, %s147
      %p156 = scmp.eq.s32.totalorder %s27, 1
      %p157 = por %p155, %p156
      %p158 = scmp.ne.s32.totalorder %s147, %s148
      %p159 = scmp.eq.s32.totalorder %s27, 0
      %p160 = por %p158, %p159
      %p161 = scmp.ne.s32.totalorder %s147, %s148
      %p162 = scmp.eq.s32.totalorder %s28, 1
      %p163 = por %p161, %p162
      %p165 = scmp.ne.s32.totalorder %s148, %s164
      %p166 = scmp.eq.s32.totalorder %s28, 0
      %p167 = por %p165, %p166
      %s168 = ssub.s32 %s29, %s41
      %s169 = ssub.s32 %s30, %s37
      %s170 = sor.u32 %s168, %s169
      %p171 = scmp.eq.s32.totalorder %s170, 0
      %s173 = sadd.s32 %s172, 1
      %s174 = scalar_select %p171, %s172, %s173
      %p177 = pneg %p171
      %p178 = scmp.eq.s32.totalorder %s22, 1
      %p179 = por %p177, %p178
      %p180 = scmp.ne.s32.totalorder %s172, %s175
      %p181 = scmp.eq.s32.totalorder %s22, 0
      %p182 = por %p180, %p181
      %p183 = scmp.ne.s32.totalorder %s172, %s175
      %p184 = scmp.eq.s32.totalorder %s27, 1
      %p185 = por %p183, %p184
      %p186 = scmp.ne.s32.totalorder %s175, %s176
      %p187 = scmp.eq.s32.totalorder %s27, 0
      %p188 = por %p186, %p187
      %p189 = scmp.ne.s32.totalorder %s175, %s176
      %p190 = scmp.eq.s32.totalorder %s28, 1
      %p191 = por %p189, %p190
      %p193 = scmp.ne.s32.totalorder %s176, %s192
      %p194 = scmp.eq.s32.totalorder %s28, 0
      %p195 = por %p193, %p194
      %p196 = scmp.le.s32.totalorder 1, %s22
      %p197 = scmp.lt.s32.totalorder %s22, 3
      %p198 = pnand %p196, %p197
      %p199 = pneg %p198
      // Predicated region
      $region9: #{tpu_custom_call.1} parent=5 // pred_check
        _
      $region10: #{tpu_custom_call.1} parent=5 // pred_check_branch
        %201 = sbr.rel (%p198) target = $region12
      $region11: #{tpu_custom_call.1} parent=5 // pred_region
        %s202 = ssub.s32 %s22, 1
        // Predicated region
        $region13: #{tpu_custom_call.1} parent=11 // pred_check
          %p203 = pneg %p83
        $region14: #{tpu_custom_call.1} parent=11 // pred_check_branch
          %205 = sbr.rel (%p203) target = $region16
        $region15: #{tpu_custom_call.1} parent=11 // pred_region
          %207 = vsyncadd [#allocation6], 0
          %s208 = sshll.u32 %s1, 4
          %s209 = int_to_ptr.hbm [resolvable:$true] %s208
          %s210 = sshll.u32 [#allocation5], 4
          %s211 = int_to_ptr.vmem [resolvable:$true] %s210
          %216 = dma.hbm_to_vmem [thread:$0]  %s209, 512, %s211, [#allocation6], 128, 128, 8
        $region16: #{tpu_custom_call.1} parent=11 // pred_fallthru
          _
        // Predicated region
        $region17: #{tpu_custom_call.1} parent=11 // pred_check
          %p217 = pneg %p104
        $region18: #{tpu_custom_call.1} parent=11 // pred_check_branch
          %219 = sbr.rel (%p217) target = $region20
        $region19: #{tpu_custom_call.1} parent=11 // pred_region
          _
        $region20: #{tpu_custom_call.1} parent=11 // pred_fallthru
          _
      $region12: #{tpu_custom_call.1} parent=5 // pred_fallthru
        _
      %p220 = scmp.lt.s32.totalorder %s22, 2
      // Predicated region
      $region21: #{tpu_custom_call.1} parent=5 // pred_check
        %p221 = pneg %p220
      $region22: #{tpu_custom_call.1} parent=5 // pred_check_branch
        %223 = sbr.rel (%p221) target = $region24
      $region23: #{tpu_custom_call.1} parent=5 // pred_region
        // Predicated region
        $region25: #{tpu_custom_call.1} parent=23 // pred_check
          %p224 = pneg %p56
        $region26: #{tpu_custom_call.1} parent=23 // pred_check_branch
          %226 = sbr.rel (%p224) target = $region28
        $region27: #{tpu_custom_call.1} parent=23 // pred_region
          %s227 = sand.u32 %s46, 1
          %s228 = scalar_lea.sflag [#allocation3], %s227
          %s229 = sand.u32 %s46, 1
          %s230 = smul.addr %s229, 8
          %s231 = scalar_lea.vmem [#allocation2], %s230
          %233 = vsyncadd %s228, 0
          %s234 = sadd.s32 %s30, %s29
          %s235 = smul.addr %s234, 8
          %s236 = scalar_lea.hbm %s0, %s235
          %s238 = sshll.u32 %s236, 4
          %s239 = int_to_ptr.hbm [resolvable:$true] %s238
          %s240 = sshll.u32 %s231, 4
          %s241 = int_to_ptr.vmem [resolvable:$true] %s240
          %243 = dma.hbm_to_vmem [thread:$0]  %s239, 128, %s241, %s228
        $region28: #{tpu_custom_call.1} parent=23 // pred_fallthru
          _
      $region24: #{tpu_custom_call.1} parent=5 // pred_fallthru
        _
      %p244 = scmp.le.s32.totalorder 1, %s22
      %p245 = scmp.lt.s32.totalorder %s22, 3
      %p246 = pnand %p244, %p245
      %p247 = pneg %p246
      // Predicated region
      $region29: #{tpu_custom_call.1} parent=5 // pred_check
        _
      $region30: #{tpu_custom_call.1} parent=5 // pred_check_branch
        %249 = sbr.rel (%p246) target = $region32
      $region31: #{tpu_custom_call.1} parent=5 // pred_region
        %s250 = ssub.s32 %s22, 1
        %s251 = sand.u32 %s49, 1
        %s252 = scalar_lea.sflag [#allocation3], %s251
        %s253 = sand.u32 %s49, 1
        %s254 = smul.addr %s253, 8
        %s255 = scalar_lea.vmem [#allocation2], %s254
        // Predicated region
        $region33: #{tpu_custom_call.1} parent=31 // pred_check
          %p256 = pneg %p62
        $region34: #{tpu_custom_call.1} parent=31 // pred_check_branch
          %258 = sbr.rel (%p256) target = $region36
        $region35: #{tpu_custom_call.1} parent=31 // pred_region
          %260 = dma.done %s252, 128
        $region36: #{tpu_custom_call.1} parent=31 // pred_fallthru
          _
        // Predicated region
        $region37: #{tpu_custom_call.1} parent=31 // pred_check
          %p261 = pneg %p83
        $region38: #{tpu_custom_call.1} parent=31 // pred_check_branch
          %263 = sbr.rel (%p261) target = $region40
        $region39: #{tpu_custom_call.1} parent=31 // pred_region
          %265 = dma.done [#allocation6], 512
        $region40: #{tpu_custom_call.1} parent=31 // pred_fallthru
          _
        %s266 = sand.u32 %s49, 1
        %s267 = scalar_lea.sflag [#allocation3], %s266
        %s268 = sand.u32 %s49, 1
        %s269 = smul.addr %s268, 8
        %s270 = scalar_lea.vmem [#allocation2], %s269
        %p271 = pneg %p62
        %p272 = pneg %p59
        %p273 = pneg %p83
        %p274 = pneg %p80
        %p275 = pneg %p104
        %p276 = pneg %p101
        %p277 = pneg %p132
        %p278 = pneg %p129
        %s279 = sand.u32 %s119, 1
        %s280 = scalar_lea.sflag [#allocation4], %s279
        %s281 = sand.u32 %s119, 1
        %s282 = smul.addr %s281, 8
        %s283 = scalar_lea.vmem [#allocation7], %s282
        %p284 = pneg %p160
        %p285 = pneg %p157
        %s286 = sand.u32 %s27, 1
        %s287 = scalar_lea.sflag [#allocation9], %s286
        %s288 = sand.u32 %s147, 1
        %s289 = smul.addr %s288, 8
        %s290 = scalar_lea.vmem [#allocation8], %s289
        %p291 = pneg %p188
        %p292 = pneg %p185
        %s293 = sand.u32 %s27, 1
        %s294 = scalar_lea.sflag [#allocation9], %s293
        %s295 = sand.u32 %s175, 1
        %s296 = smul.addr %s295, 8
        %s297 = scalar_lea.vmem [#allocation10], %s296
        %v298 = vld [vmem:[%s255] sm:$0xff]
        %v299 = vld [vmem:[#allocation5] sm:$0xff]
        %v300 = vld [vmem:[#allocation5 + $0x8] sm:$0xff]
        %v301 = vld [vmem:[#allocation5 + $0x10] sm:$0xff]
        %v302 = vld [vmem:[#allocation5 + $0x18] sm:$0xff]
        %v303 = vld [vmem:[%s2] sm:$0x1]
        %v305 = vperm.slane %v303, 0
        %vm307 = vcmask 261120
        %v309 = vsel %vm307, %v298, 0
        %311 = vmatpush.msra.mxu0 0.0
        %312 = vmatpush.msra.mxu0 0.0
        %313 = vmatpush.msra.mxu0 0.0
        %314 = vmatpush.msra.mxu0 0.0
        %315 = vmatpush.msra.mxu0 0.0
        %316 = vmatpush.msra.mxu0 0.0
        %317 = vmatpush.msra.mxu0 0.0
        %318 = vmatpush.msra.mxu0 0.0
        %319 = vmatpush.msra.mxu0 0.0
        %320 = vmatpush.msra.mxu0 0.0
        %321 = vmatpush.msra.mxu0 0.0
        %322 = vmatpush.msra.mxu0 0.0
        %323 = vmatpush.msra.mxu0 %v302
        %324 = vmatpush.msra.mxu0 %v301
        %325 = vmatpush.msra.mxu0 %v300
        %326 = vmatpush.msra.mxu0 %v299
        %327 = vmatmul.f32.gmra.mxu0 %v309
        %v328 = vpop.f32.mrf.mxu0
        %v329 = vadd.f32 %v305, %v328
        %330 = vdwg.mxu0
        %v331 = vmul.f32 %v329, 0.5
        %332 = vst.msk [vmem:[%s283] sm:$0xff] %vm307, %v331
        %v333 = vld [vmem:[#allocation5] sm:$0xff]
        %v334 = vld [vmem:[#allocation5 + $0x8] sm:$0xff]
        %v335 = vld [vmem:[#allocation5 + $0x10] sm:$0xff]
        %v336 = vld [vmem:[#allocation5 + $0x18] sm:$0xff]
        %v337 = vld [vmem:[%s2] sm:$0x1]
        %v339 = vperm.slane %v337, 0
        %344 = vrot.lane.b32.xlu0 %v333, 96
        %v345 = vpop.permute.xlu0 %344
        %346 = vrot.lane.b32.xlu0 %v334, 96
        %v347 = vpop.permute.xlu0 %346
        %348 = vrot.lane.b32.xlu0 %v335, 96
        %v349 = vpop.permute.xlu0 %348
        %350 = vrot.lane.b32.xlu0 %v336, 96
        %v351 = vpop.permute.xlu0 %350
        %356 = vrot.lane.b32.xlu0 %v339, 96
        %v357 = vpop.permute.xlu0 %356
        %359 = vmatpush.msra.mxu0 0.0
        %360 = vmatpush.msra.mxu0 0.0
        %361 = vmatpush.msra.mxu0 0.0
        %362 = vmatpush.msra.mxu0 0.0
        %363 = vmatpush.msra.mxu0 0.0
        %364 = vmatpush.msra.mxu0 0.0
        %365 = vmatpush.msra.mxu0 0.0
        %366 = vmatpush.msra.mxu0 0.0
        %367 = vmatpush.msra.mxu0 0.0
        %368 = vmatpush.msra.mxu0 0.0
        %369 = vmatpush.msra.mxu0 0.0
        %370 = vmatpush.msra.mxu0 0.0
        %371 = vmatpush.msra.mxu0 %v351
        %372 = vmatpush.msra.mxu0 %v349
        %373 = vmatpush.msra.mxu0 %v347
        %374 = vmatpush.msra.mxu0 %v345
        %375 = vmatmul.f32.gmra.mxu0 %v309
        %v376 = vpop.f32.mrf.mxu0
        %v377 = vadd.f32 %v357, %v376
        %378 = vdwg.mxu0
        %379 = vst.msk [vmem:[%s290] sm:$0xff] %vm307, %v377
        %v380 = vld [vmem:[#allocation5] sm:$0xff]
        %v381 = vld [vmem:[#allocation5 + $0x8] sm:$0xff]
        %v382 = vld [vmem:[#allocation5 + $0x10] sm:$0xff]
        %v383 = vld [vmem:[#allocation5 + $0x18] sm:$0xff]
        %v384 = vld [vmem:[%s2] sm:$0x1]
        %v386 = vperm.slane %v384, 0
        %391 = vrot.lane.b32.xlu0 %v380, 64
        %v392 = vpop.permute.xlu0 %391
        %393 = vrot.lane.b32.xlu0 %v381, 64
        %v394 = vpop.permute.xlu0 %393
        %395 = vrot.lane.b32.xlu0 %v382, 64
        %v396 = vpop.permute.xlu0 %395
        %397 = vrot.lane.b32.xlu0 %v383, 64
        %v398 = vpop.permute.xlu0 %397
        %403 = vrot.lane.b32.xlu0 %v386, 64
        %v404 = vpop.permute.xlu0 %403
        %406 = vmatpush.msra.mxu0 0.0
        %407 = vmatpush.msra.mxu0 0.0
        %408 = vmatpush.msra.mxu0 0.0
        %409 = vmatpush.msra.mxu0 0.0
        %410 = vmatpush.msra.mxu0 0.0
        %411 = vmatpush.msra.mxu0 0.0
        %412 = vmatpush.msra.mxu0 0.0
        %413 = vmatpush.msra.mxu0 0.0
        %414 = vmatpush.msra.mxu0 0.0
        %415 = vmatpush.msra.mxu0 0.0
        %416 = vmatpush.msra.mxu0 0.0
        %417 = vmatpush.msra.mxu0 0.0
        %418 = vmatpush.msra.mxu0 %v398
        %419 = vmatpush.msra.mxu0 %v396
        %420 = vmatpush.msra.mxu0 %v394
        %421 = vmatpush.msra.mxu0 %v392
        %422 = vmatmul.f32.gmra.mxu0 %v309
        %v423 = vpop.f32.mrf.mxu0
        %v424 = vadd.f32 %v404, %v423
        %425 = vdwg.mxu0
        %426 = vst.msk [vmem:[%s297] sm:$0xff] %vm307, %v424
        %s427 = sand.u32 %s119, 1
        %s428 = scalar_lea.sflag [#allocation4], %s427
        %s429 = sand.u32 %s119, 1
        %s430 = smul.addr %s429, 8
        %s431 = scalar_lea.vmem [#allocation7], %s430
        %s432 = sand.u32 %s27, 1
        %s433 = scalar_lea.sflag [#allocation9], %s432
        %s434 = sand.u32 %s147, 1
        %s435 = smul.addr %s434, 8
        %s436 = scalar_lea.vmem [#allocation8], %s435
        %s437 = sand.u32 %s27, 1
        %s438 = scalar_lea.sflag [#allocation9], %s437
        %s439 = sand.u32 %s175, 1
        %s440 = smul.addr %s439, 8
        %s441 = scalar_lea.vmem [#allocation10], %s440
        // Predicated region
        $region41: #{tpu_custom_call.1} parent=31 // pred_check
          %p442 = pneg %p129
        $region42: #{tpu_custom_call.1} parent=31 // pred_check_branch
          %444 = sbr.rel (%p442) target = $region44
        $region43: #{tpu_custom_call.1} parent=31 // pred_region
          %446 = vsyncadd %s428, 0
          %s447 = sadd.s32 %s32, %s31
          %s448 = smul.addr %s447, 8
          %s449 = scalar_lea.hbm %s3, %s448
          %s451 = sshll.u32 %s431, 4
          %s452 = int_to_ptr.vmem [resolvable:$true] %s451
          %s453 = sshll.u32 %s449, 4
          %s454 = int_to_ptr.hbm [resolvable:$true] %s453
          %456 = dma.vmem_to_hbm [thread:$0]  %s452, 128, %s454, %s428
        $region44: #{tpu_custom_call.1} parent=31 // pred_fallthru
          _
        // Predicated region
        $region45: #{tpu_custom_call.1} parent=31 // pred_check
          %p457 = pneg %p157
        $region46: #{tpu_custom_call.1} parent=31 // pred_check_branch
          %459 = sbr.rel (%p457) target = $region48
        $region47: #{tpu_custom_call.1} parent=31 // pred_region
          %461 = vsyncadd %s433, 0
          %s462 = sadd.s32 %s32, %s31
          %s463 = smul.addr %s462, 8
          %s464 = scalar_lea.hbm %s4, %s463
          %s466 = sshll.u32 %s436, 4
          %s467 = int_to_ptr.vmem [resolvable:$true] %s466
          %s468 = sshll.u32 %s464, 4
          %s469 = int_to_ptr.hbm [resolvable:$true] %s468
          %471 = dma.vmem_to_hbm [thread:$0]  %s467, 128, %s469, %s433
        $region48: #{tpu_custom_call.1} parent=31 // pred_fallthru
          _
        // Predicated region
        $region49: #{tpu_custom_call.1} parent=31 // pred_check
          %p472 = pneg %p185
        $region50: #{tpu_custom_call.1} parent=31 // pred_check_branch
          %474 = sbr.rel (%p472) target = $region52
        $region51: #{tpu_custom_call.1} parent=31 // pred_region
          %476 = vsyncadd %s438, 0
          %s477 = sadd.s32 %s32, %s31
          %s478 = smul.addr %s477, 8
          %s479 = scalar_lea.hbm %s5, %s478
          %s481 = sshll.u32 %s441, 4
          %s482 = int_to_ptr.vmem [resolvable:$true] %s481
          %s483 = sshll.u32 %s479, 4
          %s484 = int_to_ptr.hbm [resolvable:$true] %s483
          %486 = dma.vmem_to_hbm [thread:$0]  %s482, 128, %s484, %s438
        $region52: #{tpu_custom_call.1} parent=31 // pred_fallthru
          _
      $region32: #{tpu_custom_call.1} parent=5 // pred_fallthru
        _
      %p487 = scmp.le.s32.totalorder 2, %s22
      // Predicated region
      $region53: #{tpu_custom_call.1} parent=5 // pred_check
        %p488 = pneg %p487
      $region54: #{tpu_custom_call.1} parent=5 // pred_check_branch
        %490 = sbr.rel (%p488) target = $region56
      $region55: #{tpu_custom_call.1} parent=5 // pred_region
        %s491 = ssub.s32 %s22, 2
        // Predicated region
        $region57: #{tpu_custom_call.1} parent=55 // pred_check
          %p492 = pneg %p135
        $region58: #{tpu_custom_call.1} parent=55 // pred_check_branch
          %494 = sbr.rel (%p492) target = $region60
        $region59: #{tpu_custom_call.1} parent=55 // pred_region
          %s495 = sand.u32 %s120, 1
          %s496 = scalar_lea.sflag [#allocation4], %s495
          %s497 = sand.u32 %s120, 1
          %s498 = smul.addr %s497, 8
          %s499 = scalar_lea.vmem [#allocation7], %s498
          %501 = dma.done %s496, 128
        $region60: #{tpu_custom_call.1} parent=55 // pred_fallthru
          _
        // Predicated region
        $region61: #{tpu_custom_call.1} parent=55 // pred_check
          %p502 = pneg %p163
        $region62: #{tpu_custom_call.1} parent=55 // pred_check_branch
          %504 = sbr.rel (%p502) target = $region64
        $region63: #{tpu_custom_call.1} parent=55 // pred_region
          %s505 = sand.u32 %s28, 1
          %s506 = scalar_lea.sflag [#allocation9], %s505
          %s507 = sand.u32 %s148, 1
          %s508 = smul.addr %s507, 8
          %s509 = scalar_lea.vmem [#allocation8], %s508
          %511 = dma.done %s506, 128
        $region64: #{tpu_custom_call.1} parent=55 // pred_fallthru
          _
        // Predicated region
        $region65: #{tpu_custom_call.1} parent=55 // pred_check
          %p512 = pneg %p191
        $region66: #{tpu_custom_call.1} parent=55 // pred_check_branch
          %514 = sbr.rel (%p512) target = $region68
        $region67: #{tpu_custom_call.1} parent=55 // pred_region
          %s515 = sand.u32 %s28, 1
          %s516 = scalar_lea.sflag [#allocation9], %s515
          %s517 = sand.u32 %s176, 1
          %s518 = smul.addr %s517, 8
          %s519 = scalar_lea.vmem [#allocation10], %s518
          %521 = dma.done %s516, 128
        $region68: #{tpu_custom_call.1} parent=55 // pred_fallthru
          _
      $region56: #{tpu_custom_call.1} parent=5 // pred_fallthru
        _
    $region6: #{tpu_custom_call.1} parent=1 // loop_footer
      %s26 = sadd.s32 1, %s22
    $region7: #{tpu_custom_call.1} parent=1 // loop_footer_branch
      %21 = sbr.rel target = $region3
    $region8: #{tpu_custom_call.1} parent=1 // loop_exit
      _
    %522 = vsyncpa [#allocation3], 1
    %s523 = scalar_lea.sflag [#allocation3], 1
    %524 = vsyncpa %s523, 1
    %525 = vsyncpa [#allocation6], 1
    %526 = vsyncpa [#allocation4], 1
    %s527 = scalar_lea.sflag [#allocation4], 1
    %528 = vsyncpa %s527, 1
    %529 = vsyncpa [#allocation9], 1
    %s530 = scalar_lea.sflag [#allocation9], 1
    %531 = vsyncpa %s530, 1

</llo_original>
